<compile_context>
chip_gen: v7x
topology: tpu7x:2x2x1
jax: 0.10.0
libtpu: 0.0.40
codegen_flags: <defaults>
</compile_context>

<pallas_src>
import functools

import jax
import jax.numpy as jnp
from jax import lax
from jax.experimental import pallas as pl
from jax.experimental.pallas import tpu as pltpu


def _logits_kernel(x_t_ref, w1_ref, b1_ref, w2_ref, b2_ref, logits_ref, *, batch, tile_m):
    """Pass 1: logits^T for one batch tile (lane-dense output).

    Padded batch columns (col >= batch) are written as -inf so the downstream
    dim=0 softmax reduction ignores them.
    """
    b1 = b1_ref[...]          # (h_size, 1) — loaded once, broadcast on lanes
    b2 = b2_ref[...]          # (a_size, 1)

    # fc1 + ReLU:  (h, s) @ (s, TILE_M) -> (h, TILE_M)
    h = jnp.dot(w1_ref[...], x_t_ref[...], preferred_element_type=jnp.float32)
    h = jnp.maximum(h + b1, 0.0)

    # fc2:  (a, h) @ (h, TILE_M) -> (a, TILE_M)
    logits = jnp.dot(w2_ref[...], h, preferred_element_type=jnp.float32) + b2

    # Mask padded batch columns with -inf (valid column iff global index < batch).
    col = pl.program_id(0) * tile_m + lax.broadcasted_iota(jnp.int32, logits.shape, 1)
    logits_ref[...] = jnp.where(col < batch, logits, -jnp.inf).astype(logits_ref.dtype)


def _normalize_kernel(logits_ref, max_ref, inv_sum_ref, out_ref):
    """Pass 2: out = exp(logits - global_max) * (1 / global_sum)  (lane-dense)."""
    out_ref[...] = (
        jnp.exp(logits_ref[...] - max_ref[...]) * inv_sum_ref[...]
    ).astype(out_ref.dtype)


def policy_forward(x, w1, b1, w2, b2, *, tile_m=256):
    """softmax(fc2(relu(fc1(x))), dim=0), matching the PyTorch Policy module.

    x : (B, s_size) f32
    w1: (h_size, s_size), b1: (h_size,)   -- PyTorch nn.Linear (out, in) layout
    w2: (a_size, h_size), b2: (a_size,)
    returns (B, a_size) f32
    """
    B, s_size = x.shape
    h_size = w1.shape[0]
    a_size = w2.shape[0]

    num_tiles = pl.cdiv(B, tile_m)
    b_pad = num_tiles * tile_m

    # Put the batch on the lane axis: X^T, zero-padded to a multiple of tile_m.
    x_t = jnp.zeros((s_size, b_pad), jnp.float32).at[:, :B].set(x.astype(jnp.float32).T)
    w1f = w1.astype(jnp.float32)
    w2f = w2.astype(jnp.float32)
    b1c = b1.astype(jnp.float32).reshape(h_size, 1)
    b2c = b2.astype(jnp.float32).reshape(a_size, 1)

    const = lambda i: (0, 0)   # weights / biases: VMEM-resident across the whole grid
    tiled = lambda i: (0, i)   # batch-tiled arrays

    compiler_params = pltpu.CompilerParams(
        dimension_semantics=("parallel",),         # shards across v7x's 2 TensorCores
        vmem_limit_bytes=32 * 1024 * 1024,         # safe on v5e/v6e/v7x
    )

    # ---- Pass 1: logits^T (a_size, B_pad), padded columns = -inf ---------------------------
    logits_t = pl.pallas_call(
        functools.partial(_logits_kernel, batch=B, tile_m=tile_m),
        out_shape=jax.ShapeDtypeStruct((a_size, b_pad), jnp.float32),
        grid=(num_tiles,),
        in_specs=[
            pl.BlockSpec((s_size, tile_m), tiled),
            pl.BlockSpec((h_size, s_size), const),
            pl.BlockSpec((h_size, 1), const),
            pl.BlockSpec((a_size, h_size), const),
            pl.BlockSpec((a_size, 1), const),
        ],
        out_specs=pl.BlockSpec((a_size, tile_m), tiled),
        compiler_params=compiler_params,
        cost_estimate=pl.CostEstimate(
            flops=2 * b_pad * (s_size * h_size + h_size * a_size),
            transcendentals=0,
            bytes_accessed=4 * (b_pad * (s_size + a_size)
                                + h_size * s_size + a_size * h_size + h_size + a_size),
        ),
    )(x_t, w1f, b1c, w2f, b2c)

    # ---- Tiny global dim=0 combine (a_size rows): exact max / sum / reciprocal -------------
    gmax = jnp.max(logits_t, axis=1, keepdims=True)                        # (a_size, 1)
    gsum = jnp.sum(jnp.exp(logits_t - gmax), axis=1, keepdims=True)        # (a_size, 1)
    inv_sum = 1.0 / gsum                                                   # once per forward

    # ---- Pass 2: normalize (lane-dense), padded columns -> 0 --------------------------------
    probs_t = pl.pallas_call(
        _normalize_kernel,
        out_shape=jax.ShapeDtypeStruct((a_size, b_pad), jnp.float32),
        grid=(num_tiles,),
        in_specs=[
            pl.BlockSpec((a_size, tile_m), tiled),
            pl.BlockSpec((a_size, 1), const),
            pl.BlockSpec((a_size, 1), const),
        ],
        out_specs=pl.BlockSpec((a_size, tile_m), tiled),
        compiler_params=compiler_params,
        cost_estimate=pl.CostEstimate(
            flops=2 * a_size * b_pad,
            transcendentals=a_size * b_pad,
            bytes_accessed=4 * (2 * a_size * b_pad + 2 * a_size),
        ),
    )(logits_t, gmax, inv_sum)

    # Back to the PyTorch (B, a_size) orientation, dropping padded columns.
    return probs_t[:, :B].T


def init_params(key, s_size=6, h_size=32, a_size=3):
    # PyTorch-style uniform(-1/sqrt(fan_in), 1/sqrt(fan_in)) init, (out, in) weight layout.
    k1, k2, k3, k4 = jax.random.split(key, 4)
    lim1 = 1.0 / jnp.sqrt(float(s_size))
    lim2 = 1.0 / jnp.sqrt(float(h_size))
    w1 = jax.random.uniform(k1, (h_size, s_size), jnp.float32, -lim1, lim1)
    b1 = jax.random.uniform(k2, (h_size,), jnp.float32, -lim1, lim1)
    w2 = jax.random.uniform(k3, (a_size, h_size), jnp.float32, -lim2, lim2)
    b2 = jax.random.uniform(k4, (a_size,), jnp.float32, -lim2, lim2)
    return w1, b1, w2, b2


if __name__ == "__main__":
    key = jax.random.PRNGKey(0)
    k_params, k_x1, k_x2 = jax.random.split(key, 3)

    s_size, h_size, a_size = 6, 32, 3
    w1, b1, w2, b2 = init_params(k_params, s_size, h_size, a_size)

    fwd = jax.jit(policy_forward, static_argnames=("tile_m",))

    def ref_forward(x):
        # Same semantics as the PyTorch module (softmax over dim=0).
        h = jnp.maximum(x @ w1.T + b1, 0.0)
        logits = h @ w2.T + b2
        return jax.nn.softmax(logits, axis=0)

    ok = True

    # Small batch (the Policy use-case) — exercises the padding / -inf masking path.
    x_small = jax.random.normal(k_x1, (2, s_size), jnp.float32)
    out_small = jax.block_until_ready(fwd(x_small, w1, b1, w2, b2))
    ok &= out_small.shape == (2, a_size)
    ok &= bool(jnp.allclose(out_small, ref_forward(x_small), atol=5e-5, rtol=1e-4))

    # Larger, non-multiple-of-tile batch — exercises the multi-tile parallel grid and the
    # cross-tile dim=0 softmax reduction.
    x_big = jax.random.normal(k_x2, (700, s_size), jnp.float32)
    out_big = jax.block_until_ready(fwd(x_big, w1, b1, w2, b2))
    ok &= out_big.shape == (700, a_size)
    ok &= bool(jnp.allclose(out_big, ref_forward(x_big), atol=5e-5, rtol=1e-4))

    if ok:
        print("KERNEL_OK")
    else:
        raise SystemExit("mismatch vs plain-JAX reference")
</pallas_src>

<mosaic_0001>
module attributes {stable_mosaic.version = 11 : i64} {
  func.func @_logits_kernel(%arg0: i32, %arg1: memref<6x256xf32, #tpu.memory_space<vmem>>, %arg2: memref<32x6xf32, #tpu.memory_space<vmem>>, %arg3: memref<32x1xf32, #tpu.memory_space<vmem>>, %arg4: memref<3x32xf32, #tpu.memory_space<vmem>>, %arg5: memref<3x1xf32, #tpu.memory_space<vmem>>, %arg6: memref<3x256xf32, #tpu.memory_space<vmem>>) attributes {dimension_semantics = [#tpu.dimension_semantics<parallel>], iteration_bounds = array<i64: 1>, scalar_prefetch = 0 : i64, scratch_operands = 0 : i64, tpu.core_type = #tpu.core_type<tc>, window_params = [{transform_indices = @transform_0, window_bounds = array<i64: 6, 256>}, {pipeline_mode = #tpu.pipeline_mode<synchronous>, transform_indices = @transform_1, window_bounds = array<i64: 32, 6>}, {pipeline_mode = #tpu.pipeline_mode<synchronous>, transform_indices = @transform_2, window_bounds = array<i64: 32, 1>}, {pipeline_mode = #tpu.pipeline_mode<synchronous>, transform_indices = @transform_3, window_bounds = array<i64: 3, 32>}, {pipeline_mode = #tpu.pipeline_mode<synchronous>, transform_indices = @transform_4, window_bounds = array<i64: 3, 1>}, {transform_indices = @transform_5, window_bounds = array<i64: 3, 256>}]} {
    %c0 = arith.constant 0 : index
    %c0_0 = arith.constant 0 : index
    %0 = vector.load %arg3[%c0, %c0_0] : memref<32x1xf32, #tpu.memory_space<vmem>>, vector<32x1xf32>
    %c0_1 = arith.constant 0 : index
    %c0_2 = arith.constant 0 : index
    %1 = vector.load %arg5[%c0_1, %c0_2] : memref<3x1xf32, #tpu.memory_space<vmem>>, vector<3x1xf32>
    %c0_3 = arith.constant 0 : index
    %c0_4 = arith.constant 0 : index
    %2 = vector.load %arg2[%c0_3, %c0_4] : memref<32x6xf32, #tpu.memory_space<vmem>>, vector<32x6xf32>
    %c0_5 = arith.constant 0 : index
    %c0_6 = arith.constant 0 : index
    %3 = vector.load %arg1[%c0_5, %c0_6] : memref<6x256xf32, #tpu.memory_space<vmem>>, vector<6x256xf32>
    %cst = arith.constant dense<0.000000e+00> : vector<32x256xf32>
    %4 = tpu.matmul %2, %3, %cst {dimension_numbers = #tpu.dot_dimension_numbers<[1], [0], [0], [1], [0, 0, 1, 1], [], []>} : vector<32x6xf32>, vector<6x256xf32>, vector<32x256xf32> -> vector<32x256xf32>
    %5 = vector.broadcast %0 : vector<32x1xf32> to vector<32x256xf32>
    %6 = arith.addf %4, %5 : vector<32x256xf32>
    %cst_7 = arith.constant 0.000000e+00 : f32
    %7 = vector.broadcast %cst_7 : f32 to vector<32x256xf32>
    %8 = arith.maximumf %6, %7 : vector<32x256xf32>
    %c0_8 = arith.constant 0 : index
    %c0_9 = arith.constant 0 : index
    %9 = vector.load %arg4[%c0_8, %c0_9] : memref<3x32xf32, #tpu.memory_space<vmem>>, vector<3x32xf32>
    %cst_10 = arith.constant dense<0.000000e+00> : vector<3x256xf32>
    %10 = tpu.matmul %9, %8, %cst_10 {dimension_numbers = #tpu.dot_dimension_numbers<[1], [0], [0], [1], [0, 0, 1, 1], [], []>} : vector<3x32xf32>, vector<32x256xf32>, vector<3x256xf32> -> vector<3x256xf32>
    %11 = vector.broadcast %1 : vector<3x1xf32> to vector<3x256xf32>
    %12 = arith.addf %10, %11 : vector<3x256xf32>
    %c256_i32 = arith.constant 256 : i32
    %13 = arith.muli %arg0, %c256_i32 : i32
    %14 = tpu.iota {dimensions = array<i32: 1>} : vector<3x256xi32>
    %15 = vector.broadcast %13 : i32 to vector<3x256xi32>
    %16 = arith.addi %15, %14 : vector<3x256xi32>
    %c2_i32 = arith.constant 2 : i32
    %17 = vector.broadcast %c2_i32 : i32 to vector<3x256xi32>
    %18 = arith.cmpi slt, %16, %17 : vector<3x256xi32>
    %cst_11 = arith.constant 0xFF800000 : f32
    %19 = vector.broadcast %cst_11 : f32 to vector<3x256xf32>
    %20 = arith.select %18, %12, %19 : vector<3x256xi1>, vector<3x256xf32>
    %c0_12 = arith.constant 0 : index
    %c0_13 = arith.constant 0 : index
    %21 = vector.load %arg6[%c0_12, %c0_13] : memref<3x256xf32, #tpu.memory_space<vmem>>, vector<3x256xf32>
    tpu.vector_store %arg6[%c0_12, %c0_13], %20 {strides = array<i32>} : memref<3x256xf32, #tpu.memory_space<vmem>>, vector<3x256xf32>,
    return
  }
  func.func @transform_0(%arg0: i32) -> (i32, i32) {
    %c0_i32 = arith.constant 0 : i32
    %c0_i32_0 = arith.constant 0 : i32
    return %c0_i32, %arg0 : i32, i32
  }
  func.func @transform_1(%arg0: i32) -> (i32, i32) {
    %c0_i32 = arith.constant 0 : i32
    %c0_i32_0 = arith.constant 0 : i32
    %c0_i32_1 = arith.constant 0 : i32
    return %c0_i32, %c0_i32_0 : i32, i32
  }
  func.func @transform_2(%arg0: i32) -> (i32, i32) {
    %c0_i32 = arith.constant 0 : i32
    %c0_i32_0 = arith.constant 0 : i32
    %c0_i32_1 = arith.constant 0 : i32
    return %c0_i32, %c0_i32_0 : i32, i32
  }
  func.func @transform_3(%arg0: i32) -> (i32, i32) {
    %c0_i32 = arith.constant 0 : i32
    %c0_i32_0 = arith.constant 0 : i32
    %c0_i32_1 = arith.constant 0 : i32
    return %c0_i32, %c0_i32_0 : i32, i32
  }
  func.func @transform_4(%arg0: i32) -> (i32, i32) {
    %c0_i32 = arith.constant 0 : i32
    %c0_i32_0 = arith.constant 0 : i32
    %c0_i32_1 = arith.constant 0 : i32
    return %c0_i32, %c0_i32_0 : i32, i32
  }
  func.func @transform_5(%arg0: i32) -> (i32, i32) {
    %c0_i32 = arith.constant 0 : i32
    %c0_i32_0 = arith.constant 0 : i32
    return %c0_i32, %arg0 : i32, i32
  }
}

module attributes {stable_mosaic.version = 11 : i64} {
  func.func @_normalize_kernel(%arg0: i32, %arg1: memref<3x256xf32, #tpu.memory_space<vmem>>, %arg2: memref<3x1xf32, #tpu.memory_space<vmem>>, %arg3: memref<3x1xf32, #tpu.memory_space<vmem>>, %arg4: memref<3x256xf32, #tpu.memory_space<vmem>>) attributes {dimension_semantics = [#tpu.dimension_semantics<parallel>], iteration_bounds = array<i64: 1>, scalar_prefetch = 0 : i64, scratch_operands = 0 : i64, tpu.core_type = #tpu.core_type<tc>, window_params = [{transform_indices = @transform_0, window_bounds = array<i64: 3, 256>}, {pipeline_mode = #tpu.pipeline_mode<synchronous>, transform_indices = @transform_1, window_bounds = array<i64: 3, 1>}, {pipeline_mode = #tpu.pipeline_mode<synchronous>, transform_indices = @transform_2, window_bounds = array<i64: 3, 1>}, {transform_indices = @transform_3, window_bounds = array<i64: 3, 256>}]} {
    %c0 = arith.constant 0 : index
    %c0_0 = arith.constant 0 : index
    %0 = vector.load %arg1[%c0, %c0_0] : memref<3x256xf32, #tpu.memory_space<vmem>>, vector<3x256xf32>
    %c0_1 = arith.constant 0 : index
    %c0_2 = arith.constant 0 : index
    %1 = vector.load %arg2[%c0_1, %c0_2] : memref<3x1xf32, #tpu.memory_space<vmem>>, vector<3x1xf32>
    %2 = vector.broadcast %1 : vector<3x1xf32> to vector<3x256xf32>
    %3 = arith.subf %0, %2 : vector<3x256xf32>
    %4 = math.exp %3 : vector<3x256xf32>
    %c0_3 = arith.constant 0 : index
    %c0_4 = arith.constant 0 : index
    %5 = vector.load %arg3[%c0_3, %c0_4] : memref<3x1xf32, #tpu.memory_space<vmem>>, vector<3x1xf32>
    %6 = vector.broadcast %5 : vector<3x1xf32> to vector<3x256xf32>
    %7 = arith.mulf %4, %6 : vector<3x256xf32>
    %c0_5 = arith.constant 0 : index
    %c0_6 = arith.constant 0 : index
    %8 = vector.load %arg4[%c0_5, %c0_6] : memref<3x256xf32, #tpu.memory_space<vmem>>, vector<3x256xf32>
    tpu.vector_store %arg4[%c0_5, %c0_6], %7 {strides = array<i32>} : memref<3x256xf32, #tpu.memory_space<vmem>>, vector<3x256xf32>,
    return
  }
  func.func @transform_0(%arg0: i32) -> (i32, i32) {
    %c0_i32 = arith.constant 0 : i32
    %c0_i32_0 = arith.constant 0 : i32
    return %c0_i32, %arg0 : i32, i32
  }
  func.func @transform_1(%arg0: i32) -> (i32, i32) {
    %c0_i32 = arith.constant 0 : i32
    %c0_i32_0 = arith.constant 0 : i32
    %c0_i32_1 = arith.constant 0 : i32
    return %c0_i32, %c0_i32_0 : i32, i32
  }
  func.func @transform_2(%arg0: i32) -> (i32, i32) {
    %c0_i32 = arith.constant 0 : i32
    %c0_i32_0 = arith.constant 0 : i32
    %c0_i32_1 = arith.constant 0 : i32
    return %c0_i32, %c0_i32_0 : i32, i32
  }
  func.func @transform_3(%arg0: i32) -> (i32, i32) {
    %c0_i32 = arith.constant 0 : i32
    %c0_i32_0 = arith.constant 0 : i32
    return %c0_i32, %arg0 : i32, i32
  }
}

</mosaic_0001>

<llo_original>
// kernel: policy_forward.3
$region0: #{policy_forward.3}
  #allocation0 [shape = 'u32[]', space=smem, size = 0x4, offset = 0x4, fixed_abs, tag = 'smem constant byte address 0x4 - core index']
  #allocation1 [shape = 'u32[144,128]{1,0:T(1,128)}', space=vmem, size = 0x12000, scoped, tag = 'internal scratch']
  %s0 = inlined_call_operand.vmem [shape: f32[3,256], index: 0, kind: input, shape index: {}]
  %s1 = inlined_call_operand.vmem [shape: f32[3,1], index: 1, kind: input, shape index: {}]
  %s2 = inlined_call_operand.vmem [shape: f32[3,1], index: 2, kind: input, shape index: {}]
  %s3 = inlined_call_operand.vmem [shape: f32[3,256], index: 3, kind: output, shape index: {}]
  %s4 = sld [smem:[#allocation0]]
  $region22: #{policy_forward.3} parent=0
    _
  %s6 = ssub.s32 1, %s4
  %s7 = scalar_select 0, %s6, %s4
  // Predicated region
  $region2: #{policy_forward.3} parent=0 // pred_check
    _
  $region3: #{policy_forward.3} parent=0 // pred_check_branch
    %9 = sbr.rel (0) target = $region5
  $region4: #{policy_forward.3} parent=0 // pred_region
    _
  $region5: #{policy_forward.3} parent=0 // pred_fallthru
    _
  // Predicated region
  $region6: #{policy_forward.3} parent=0 // pred_check
    _
  $region7: #{policy_forward.3} parent=0 // pred_check_branch
    %11 = sbr.rel (0) target = $region9
  $region8: #{policy_forward.3} parent=0 // pred_region
    _
  $region9: #{policy_forward.3} parent=0 // pred_fallthru
    _
  // Predicated region
  $region10: #{policy_forward.3} parent=0 // pred_check
    _
  $region11: #{policy_forward.3} parent=0 // pred_check_branch
    %13 = sbr.rel (0) target = $region13
  $region12: #{policy_forward.3} parent=0 // pred_region
    _
  $region13: #{policy_forward.3} parent=0 // pred_fallthru
    _
  %v14 = vld [vmem:[%s0] sm:$0x77]
  %v15 = vld [vmem:[%s1] sm:$0x7]
  %17 = vset.pattern.permute.xlu0 0
  %18 = vperm.xlu0 %17, %v15
  %v19 = vpop.permute.xlu0 %18
  %v21 = vunpack.c.l.s4 839922192
  %v22 = vunpack.c.0.s8 %v21
  %v23 = vlaneseq
  %v24 = vshrl.u32 %v23, 7
  %v25 = vsub.s32 %v22, %v24
  %v26 = vrot.slane %v19, %v25
  %v28 = vsub.f32 %v14, %v26
  %v29 = vmul.f32 %v28, 1.442695
  %v30 = vpow.pop %v29
  %v31 = vld [vmem:[%s2] sm:$0x7]
  %33 = vset.pattern.permute.xlu0 0
  %34 = vperm.xlu0 %33, %v31
  %v35 = vpop.permute.xlu0 %34
  %v37 = vunpack.c.l.s4 839922192
  %v38 = vunpack.c.0.s8 %v37
  %v39 = vlaneseq
  %v40 = vshrl.u32 %v39, 7
  %v41 = vsub.s32 %v38, %v40
  %v42 = vrot.slane %v35, %v41
  %v44 = vmul.f32 %v30, %v42
  %45 = vst [vmem:[%s3] sm:$0x77] %v44
  // Predicated region
  $region14: #{policy_forward.3} parent=0 // pred_check
    _
  $region15: #{policy_forward.3} parent=0 // pred_check_branch
    %47 = sbr.rel (0) target = $region17
  $region16: #{policy_forward.3} parent=0 // pred_region
    _
  $region17: #{policy_forward.3} parent=0 // pred_fallthru
    _
  // Predicated region
  $region18: #{policy_forward.3} parent=0 // pred_check
    _
  $region19: #{policy_forward.3} parent=0 // pred_check_branch
    %49 = sbr.rel (0) target = $region21
  $region20: #{policy_forward.3} parent=0 // pred_region
    _
  $region21: #{policy_forward.3} parent=0 // pred_fallthru
    _

// kernel: policy_forward.2
$region0: #{policy_forward.2}
  #allocation0 [shape = 'u32[]', space=smem, size = 0x4, offset = 0x4, fixed_abs, tag = 'smem constant byte address 0x4 - core index']
  #allocation1 [shape = 'u32[144,128]{1,0:T(1,128)}', space=vmem, size = 0x12000, scoped, tag = 'internal scratch']
  %s0 = inlined_call_operand.vmem [shape: f32[6,256], index: 0, kind: input, shape index: {}]
  %s1 = inlined_call_operand.vmem [shape: f32[32,6], index: 1, kind: input, shape index: {}]
  %s2 = inlined_call_operand.vmem [shape: f32[32,1], index: 2, kind: input, shape index: {}]
  %s3 = inlined_call_operand.vmem [shape: f32[3,32], index: 3, kind: input, shape index: {}]
  %s4 = inlined_call_operand.vmem [shape: f32[3,1], index: 4, kind: input, shape index: {}]
  %s5 = inlined_call_operand.vmem [shape: f32[3,256], index: 5, kind: output, shape index: {}]
  %s6 = sld [smem:[#allocation0]]
  $region30: #{policy_forward.2} parent=0
    _
  %s8 = ssub.s32 1, %s6
  %s9 = scalar_select 0, %s8, %s6
  // Predicated region
  $region2: #{policy_forward.2} parent=0 // pred_check
    _
  $region3: #{policy_forward.2} parent=0 // pred_check_branch
    %11 = sbr.rel (0) target = $region5
  $region4: #{policy_forward.2} parent=0 // pred_region
    _
  $region5: #{policy_forward.2} parent=0 // pred_fallthru
    _
  // Predicated region
  $region6: #{policy_forward.2} parent=0 // pred_check
    _
  $region7: #{policy_forward.2} parent=0 // pred_check_branch
    %13 = sbr.rel (0) target = $region9
  $region8: #{policy_forward.2} parent=0 // pred_region
    _
  $region9: #{policy_forward.2} parent=0 // pred_fallthru
    _
  // Predicated region
  $region10: #{policy_forward.2} parent=0 // pred_check
    _
  $region11: #{policy_forward.2} parent=0 // pred_check_branch
    %15 = sbr.rel (0) target = $region13
  $region12: #{policy_forward.2} parent=0 // pred_region
    _
  $region13: #{policy_forward.2} parent=0 // pred_fallthru
    _
  // Predicated region
  $region14: #{policy_forward.2} parent=0 // pred_check
    _
  $region15: #{policy_forward.2} parent=0 // pred_check_branch
    %17 = sbr.rel (0) target = $region17
  $region16: #{policy_forward.2} parent=0 // pred_region
    _
  $region17: #{policy_forward.2} parent=0 // pred_fallthru
    _
  // Predicated region
  $region18: #{policy_forward.2} parent=0 // pred_check
    _
  $region19: #{policy_forward.2} parent=0 // pred_check_branch
    %19 = sbr.rel (0) target = $region21
  $region20: #{policy_forward.2} parent=0 // pred_region
    _
  $region21: #{policy_forward.2} parent=0 // pred_fallthru
    _
  %v20 = vld [vmem:[%s2] sm:$0xff]
  %v21 = vld [vmem:[%s2 + $0x8] sm:$0xff]
  %v22 = vld [vmem:[%s2 + $0x10] sm:$0xff]
  %v23 = vld [vmem:[%s2 + $0x18] sm:$0xff]
  %v24 = vld [vmem:[%s4] sm:$0x7]
  %v25 = vld [vmem:[%s1] sm:$0xff]
  %v26 = vld [vmem:[%s1 + $0x8] sm:$0xff]
  %v27 = vld [vmem:[%s1 + $0x10] sm:$0xff]
  %v28 = vld [vmem:[%s1 + $0x18] sm:$0xff]
  %v29 = vld [vmem:[%s0] sm:$0x3f]
  %v30 = vld [vmem:[%s0 + $0x8] sm:$0x3f]
  %32 = vset.pattern.permute.xlu0 0
  %33 = vperm.xlu0 %32, %v20
  %v34 = vpop.permute.xlu0 %33
  %37 = vset.pattern.permute.xlu0 0
  %38 = vperm.xlu0 %37, %v21
  %v39 = vpop.permute.xlu0 %38
  %42 = vset.pattern.permute.xlu0 0
  %43 = vperm.xlu0 %42, %v22
  %v44 = vpop.permute.xlu0 %43
  %47 = vset.pattern.permute.xlu0 0
  %48 = vperm.xlu0 %47, %v23
  %v49 = vpop.permute.xlu0 %48
  %vm51 = vcmask 48128
  %v53 = vsel %vm51, %v25, 0
  %v56 = vsel %vm51, %v26, 0
  %v59 = vsel %vm51, %v27, 0
  %v62 = vsel %vm51, %v28, 0
  %vm64 = vcmask 1045504
  %v66 = vsel %vm64, %v29, 0
  %v69 = vsel %vm64, %v30, 0
  %71 = vmatprep.subr.mxu0 %v69
  %72 = vmatpush1.msra.mxu0 %v66
  %73 = vmatprep.subr.mxu0 0.0
  %74 = vmatpush1.msra.mxu0 0.0
  %75 = vmatprep.subr.mxu0 0.0
  %76 = vmatpush1.msra.mxu0 0.0
  %77 = vmatprep.subr.mxu0 0.0
  %78 = vmatpush1.msra.mxu0 0.0
  %79 = vmatprep.subr.mxu0 0.0
  %80 = vmatpush1.msra.mxu0 0.0
  %81 = vmatprep.subr.mxu0 0.0
  %82 = vmatpush1.msra.mxu0 0.0
  %83 = vmatprep.subr.mxu0 0.0
  %84 = vmatpush1.msra.mxu0 0.0
  %85 = vmatprep.subr.mxu0 0.0
  %86 = vmatpush1.msra.mxu0 0.0
  %87 = vmatprep.subr.mxu0 0.0
  %88 = vmatpush1.msra.mxu0 0.0
  %89 = vmatprep.subr.mxu0 0.0
  %90 = vmatpush1.msra.mxu0 0.0
  %91 = vmatprep.subr.mxu0 0.0
  %92 = vmatpush1.msra.mxu0 0.0
  %93 = vmatprep.subr.mxu0 0.0
  %94 = vmatpush1.msra.mxu0 0.0
  %95 = vmatprep.subr.mxu0 0.0
  %96 = vmatpush1.msra.mxu0 0.0
  %97 = vmatprep.subr.mxu0 0.0
  %98 = vmatpush1.msra.mxu0 0.0
  %99 = vmatprep.subr.mxu0 0.0
  %100 = vmatpush1.msra.mxu0 0.0
  %101 = vmatprep.subr.mxu0 0.0
  %102 = vmatpush1.msra.mxu0 0.0
  %103 = vmatprep.subr.mxu0 0.0
  %104 = vmatpush1.msra.mxu0 0.0
  %105 = vmatprep.subr.mxu0 0.0
  %106 = vmatpush1.msra.mxu0 0.0
  %107 = vmatprep.subr.mxu0 0.0
  %108 = vmatpush1.msra.mxu0 0.0
  %109 = vmatprep.subr.mxu0 0.0
  %110 = vmatpush1.msra.mxu0 0.0
  %111 = vmatprep.subr.mxu0 0.0
  %112 = vmatpush1.msra.mxu0 0.0
  %113 = vmatprep.subr.mxu0 0.0
  %114 = vmatpush1.msra.mxu0 0.0
  %115 = vmatprep.subr.mxu0 0.0
  %116 = vmatpush1.msra.mxu0 0.0
  %117 = vmatprep.subr.mxu0 0.0
  %118 = vmatpush1.msra.mxu0 0.0
  %119 = vmatprep.subr.mxu0 0.0
  %120 = vmatpush1.msra.mxu0 0.0
  %121 = vmatprep.subr.mxu0 0.0
  %122 = vmatpush1.msra.mxu0 0.0
  %123 = vmatprep.subr.mxu0 0.0
  %124 = vmatpush1.msra.mxu0 0.0
  %125 = vmatprep.subr.mxu0 0.0
  %126 = vmatpush1.msra.mxu0 0.0
  %127 = vmatprep.subr.mxu0 0.0
  %128 = vmatpush1.msra.mxu0 0.0
  %129 = vmatprep.subr.mxu0 0.0
  %130 = vmatpush1.msra.mxu0 0.0
  %131 = vmatprep.subr.mxu0 0.0
  %132 = vmatpush1.msra.mxu0 0.0
  %133 = vmatprep.subr.mxu0 0.0
  %134 = vmatpush1.msra.mxu0 0.0
  %135 = vmatprep.mubr.f32.mxu0 0.0
  %136 = vmatmul.mubr.f32.gmra.mrb[0].mxu0 %v53
  %v137 = vpop.f32.mrb[0].mxu0
  %v138 = vadd.f32 %v34, %v137
  %v139 = vpop.f32.mrb[0].mxu0
  %v140 = vadd.f32 %v34, %v139
  %141 = vmatprep.mubr.f32.mxu0 0.0
  %142 = vmatmul.mubr.f32.gmra.mrb[0].mxu0 %v56
  %v143 = vpop.f32.mrb[0].mxu0
  %v144 = vadd.f32 %v39, %v143
  %v145 = vpop.f32.mrb[0].mxu0
  %v146 = vadd.f32 %v39, %v145
  %147 = vmatprep.mubr.f32.mxu0 0.0
  %148 = vmatmul.mubr.f32.gmra.mrb[0].mxu0 %v59
  %v149 = vpop.f32.mrb[0].mxu0
  %v150 = vadd.f32 %v44, %v149
  %v151 = vpop.f32.mrb[0].mxu0
  %v152 = vadd.f32 %v44, %v151
  %153 = vmatprep.mubr.f32.mxu0 0.0
  %154 = vmatmul.mubr.f32.gmra.mrb[0].mxu0 %v62
  %v155 = vpop.f32.mrb[0].mxu0
  %v156 = vadd.f32 %v49, %v155
  %v157 = vpop.f32.mrb[0].mxu0
  %v158 = vadd.f32 %v49, %v157
  %159 = vdwg.mxu0
  %v160 = vmax.f32 %v138, 0.0
  %v161 = vmax.f32 %v140, 0.0
  %v162 = vmax.f32 %v144, 0.0
  %v163 = vmax.f32 %v146, 0.0
  %v164 = vmax.f32 %v150, 0.0
  %v165 = vmax.f32 %v152, 0.0
  %v166 = vmax.f32 %v156, 0.0
  %v167 = vmax.f32 %v158, 0.0
  %v168 = vld [vmem:[%s3] sm:$0x7]
  %170 = vset.pattern.permute.xlu0 0
  %171 = vperm.xlu0 %170, %v24
  %v172 = vpop.permute.xlu0 %171
  %vm174 = vcmask 261120
  %v176 = vsel %vm174, %v168, 0
  %178 = vmatprep.subr.mxu0 %v161
  %179 = vmatpush1.msra.mxu0 %v160
  %180 = vmatprep.subr.mxu0 %v163
  %181 = vmatpush1.msra.mxu0 %v162
  %182 = vmatprep.subr.mxu0 %v165
  %183 = vmatpush1.msra.mxu0 %v164
  %184 = vmatprep.subr.mxu0 %v167
  %185 = vmatpush1.msra.mxu0 %v166
  %186 = vmatprep.subr.mxu0 0.0
  %187 = vmatpush1.msra.mxu0 0.0
  %188 = vmatprep.subr.mxu0 0.0
  %189 = vmatpush1.msra.mxu0 0.0
  %190 = vmatprep.subr.mxu0 0.0
  %191 = vmatpush1.msra.mxu0 0.0
  %192 = vmatprep.subr.mxu0 0.0
  %193 = vmatpush1.msra.mxu0 0.0
  %194 = vmatprep.subr.mxu0 0.0
  %195 = vmatpush1.msra.mxu0 0.0
  %196 = vmatprep.subr.mxu0 0.0
  %197 = vmatpush1.msra.mxu0 0.0
  %198 = vmatprep.subr.mxu0 0.0
  %199 = vmatpush1.msra.mxu0 0.0
  %200 = vmatprep.subr.mxu0 0.0
  %201 = vmatpush1.msra.mxu0 0.0
  %202 = vmatprep.subr.mxu0 0.0
  %203 = vmatpush1.msra.mxu0 0.0
  %204 = vmatprep.subr.mxu0 0.0
  %205 = vmatpush1.msra.mxu0 0.0
  %206 = vmatprep.subr.mxu0 0.0
  %207 = vmatpush1.msra.mxu0 0.0
  %208 = vmatprep.subr.mxu0 0.0
  %209 = vmatpush1.msra.mxu0 0.0
  %210 = vmatprep.subr.mxu0 0.0
  %211 = vmatpush1.msra.mxu0 0.0
  %212 = vmatprep.subr.mxu0 0.0
  %213 = vmatpush1.msra.mxu0 0.0
  %214 = vmatprep.subr.mxu0 0.0
  %215 = vmatpush1.msra.mxu0 0.0
  %216 = vmatprep.subr.mxu0 0.0
  %217 = vmatpush1.msra.mxu0 0.0
  %218 = vmatprep.subr.mxu0 0.0
  %219 = vmatpush1.msra.mxu0 0.0
  %220 = vmatprep.subr.mxu0 0.0
  %221 = vmatpush1.msra.mxu0 0.0
  %222 = vmatprep.subr.mxu0 0.0
  %223 = vmatpush1.msra.mxu0 0.0
  %224 = vmatprep.subr.mxu0 0.0
  %225 = vmatpush1.msra.mxu0 0.0
  %226 = vmatprep.subr.mxu0 0.0
  %227 = vmatpush1.msra.mxu0 0.0
  %228 = vmatprep.subr.mxu0 0.0
  %229 = vmatpush1.msra.mxu0 0.0
  %230 = vmatprep.subr.mxu0 0.0
  %231 = vmatpush1.msra.mxu0 0.0
  %232 = vmatprep.subr.mxu0 0.0
  %233 = vmatpush1.msra.mxu0 0.0
  %234 = vmatprep.subr.mxu0 0.0
  %235 = vmatpush1.msra.mxu0 0.0
  %236 = vmatprep.subr.mxu0 0.0
  %237 = vmatpush1.msra.mxu0 0.0
  %238 = vmatprep.subr.mxu0 0.0
  %239 = vmatpush1.msra.mxu0 0.0
  %240 = vmatprep.subr.mxu0 0.0
  %241 = vmatpush1.msra.mxu0 0.0
  %242 = vmatprep.mubr.f32.mxu0 0.0
  %243 = vmatmul.mubr.f32.gmra.mrb[0].mxu0 %v176
  %v244 = vpop.f32.mrb[0].mxu0
  %v245 = vadd.f32 %v172, %v244
  %v246 = vpop.f32.mrb[0].mxu0
  %v247 = vadd.f32 %v172, %v246
  %248 = vdwg.mxu0
  %s249 = smul.u32 0, 256
  %v250 = vlaneseq
  %v251 = vand.u32 %v250, 127
  %v252 = vadd.s32 %v251, 128
  %v253 = vstv %s249
  %v254 = vadd.s32 %v253, %v251
  %v255 = vadd.s32 %v253, %v252
  %vm256 = vcmp.lt.s32.totalorder %v254, 2
  %vm257 = vcmp.lt.s32.totalorder %v255, 2
  %v258 = vsel %vm256, %v245, -inf
  %v259 = vsel %vm257, %v247, -inf
  %v262 = vcombine.low %v258, %v259
  %264 = vst [vmem:[%s5] sm:$0x77] %v262
  // Predicated region
  $region22: #{policy_forward.2} parent=0 // pred_check
    _
  $region23: #{policy_forward.2} parent=0 // pred_check_branch
    %266 = sbr.rel (0) target = $region25
  $region24: #{policy_forward.2} parent=0 // pred_region
    _
  $region25: #{policy_forward.2} parent=0 // pred_fallthru
    _
  // Predicated region
  $region26: #{policy_forward.2} parent=0 // pred_check
    _
  $region27: #{policy_forward.2} parent=0 // pred_check_branch
    %268 = sbr.rel (0) target = $region29
  $region28: #{policy_forward.2} parent=0 // pred_region
    _
  $region29: #{policy_forward.2} parent=0 // pred_fallthru
    _

</llo_original>
